<compile_context>
chip_gen: v7x
topology: tpu7x:2x2x1
jax: 0.10.0
libtpu: 0.0.40
codegen_flags: <defaults>
</compile_context>

<pallas_src>
import jax
import jax.numpy as jnp
from jax.experimental import pallas as pl
from jax.experimental.pallas import tpu as pltpu

_HIDDEN = 64
_MAX_TB = 2048        # batch-tile upper bound (per-step overhead < ~10%)
_SPLIT_MIN_B = 512    # force G >= 2 above this batch (v7x dual-TC sharding)


def _round_up(x, m):
    return (x + m - 1) // m * m


def _dqn_kernel(obs_ref, act_ref, w1_ref, b12_ref, w2_ref, w3_ref, b3_ref,
                out_ref):
    # Fold the dim=1 concat into VMEM (lane shuffle) and run fc1 as ONE bf16
    # MXU dot with f32 accumulation.
    x = jnp.concatenate([obs_ref[...], act_ref[...]],
                        axis=-1).astype(jnp.bfloat16)                 # [TB, 2F]
    h1 = (jnp.dot(x, w1_ref[...], preferred_element_type=jnp.float32)
          + b12_ref[:, :_HIDDEN])
    h1 = jnp.maximum(h1, 0.0)

    # fc2 + relu (bf16 operands, f32 accumulate).
    h2 = (jnp.dot(h1.astype(jnp.bfloat16), w2_ref[...],
                  preferred_element_type=jnp.float32)
          + b12_ref[:, _HIDDEN:])
    h2 = jnp.maximum(h2, 0.0)

    # fc3 as VPU multiply + XLU lane reduce (w3 is a [1, 64] f32 row; b3 is an
    # SMEM scalar). Result written lane-dense as a (1, TB) row.
    q = jnp.sum(h2 * w3_ref[...], axis=-1) + b3_ref[0]                # [TB]
    out_ref[...] = q.reshape(1, 1, -1).astype(out_ref.dtype)


def prepare_params(params, num_features):
    """One-time layout prep (outside the hot path): transpose weights to
    [in, out] and cast matmul weights to bf16, pack b1|b2 into one lane-dense
    f32 row, keep w3 as an f32 row and b3 as an SMEM scalar."""
    w1, b1, w2, b2, w3, b3 = params           # PyTorch layouts: [out, in]
    del num_features  # fc1 weight is kept whole (single-dot formulation)
    w1t = jnp.asarray(w1.T, jnp.bfloat16)                        # [2F, 64]
    w2t = jnp.asarray(w2.T, jnp.bfloat16)                        # [64, 64]
    w3row = jnp.asarray(w3, jnp.float32).reshape(1, _HIDDEN)     # [1, 64]
    b12 = jnp.concatenate([b1, b2]).astype(jnp.float32).reshape(1, 2 * _HIDDEN)
    b3s = jnp.asarray(b3, jnp.float32).reshape(1)                # SMEM scalar
    return (w1t, b12, w2t, w3row, b3s)


def _vmem_limit_bytes(tb, f, in_itemsize):
    """Explicit scoped-VMEM sizing with lane/sublane padding (safe for v7x's
    64 MiB physical VMEM; streamed (TB,F) blocks lane-pad to 128)."""
    lane = lambda n: _round_up(n, 128)
    sub = lambda n: _round_up(n, 8)
    stream = 2 * 2 * sub(tb) * lane(f) * in_itemsize          # obs+act, 2 bufs
    out = 2 * sub(1) * lane(tb) * 4                           # (1,TB) f32, 2 bufs
    weights = 2 * (sub(2 * f) * lane(_HIDDEN) * 2             # w1 bf16
                   + sub(_HIDDEN) * lane(_HIDDEN) * 2         # w2 bf16
                   + sub(1) * lane(2 * _HIDDEN) * 4           # b1|b2 f32
                   + sub(1) * lane(_HIDDEN) * 4)              # w3 f32
    est = stream + out + weights
    return int(min(max(2 * est, 4 << 20), 48 << 20))


@jax.jit
def dqn_forward(obs, action, prepared_params):
    """obs: [B, F], action: [B, F] -> [B, 1] float32."""
    w1t, b12, w2t, w3row, b3s = prepared_params
    B, F = obs.shape

    # Joint G/TB selection: cap the tile at _MAX_TB, force G >= 2 for
    # non-trivial batches (v7x dual-TC), and size TB so at most 7 rows are
    # padded. No wrapper-side jnp.pad: the ragged trailing input block is
    # handled by Pallas and the tail rows are sliced off below (no batch
    # reduction happens in-kernel, so garbage rows cannot contaminate results).
    G = pl.cdiv(B, _MAX_TB)
    if B >= _SPLIT_MIN_B:
        G = max(G, 2)
    TB = _round_up(pl.cdiv(B, G), 8)
    B_pad = G * TB

    batch_spec = pl.BlockSpec((TB, F), lambda i: (i, 0))
    resident = lambda shape: pl.BlockSpec(shape, lambda i: (0, 0))

    out = pl.pallas_call(
        _dqn_kernel,
        out_shape=jax.ShapeDtypeStruct((G, 1, TB), jnp.float32),
        grid=(G,),
        in_specs=[
            batch_spec,                                          # obs    (streamed)
            batch_spec,                                          # action (streamed)
            resident((2 * F, _HIDDEN)),                          # w1 [2F, 64] bf16
            resident((1, 2 * _HIDDEN)),                          # b1|b2 packed row
            resident((_HIDDEN, _HIDDEN)),                        # w2 [64, 64] bf16
            resident((1, _HIDDEN)),                              # w3 row f32
            pl.BlockSpec(memory_space=pltpu.MemorySpace.SMEM),   # b3 scalar
        ],
        out_specs=pl.BlockSpec((1, 1, TB), lambda i: (i, 0, 0)),
        compiler_params=pltpu.CompilerParams(
            dimension_semantics=("parallel",),
            vmem_limit_bytes=_vmem_limit_bytes(
                TB, F, jnp.dtype(obs.dtype).itemsize),
        ),
    )(obs, action, w1t, b12, w2t, w3row, b3s)

    return out.reshape(B_pad)[:B].reshape(B, 1)


def init_params(key, num_features):
    """Deterministic init mimicking nn.Linear default (uniform +-1/sqrt(fan_in))."""
    def linear(k, fan_in, fan_out):
        kw, kb = jax.random.split(k)
        bound = 1.0 / jnp.sqrt(fan_in)
        w = jax.random.uniform(kw, (fan_out, fan_in), jnp.float32, -bound, bound)
        b = jax.random.uniform(kb, (fan_out,), jnp.float32, -bound, bound)
        return w, b

    k1, k2, k3 = jax.random.split(key, 3)
    w1, b1 = linear(k1, num_features * 2, 64)
    w2, b2 = linear(k2, 64, 64)
    w3, b3 = linear(k3, 64, 1)
    return (w1, b1, w2, b2, w3, b3)


def dqn_ref(obs, action, params):
    """Pure-JAX f32 reference matching the PyTorch forward exactly."""
    w1, b1, w2, b2, w3, b3 = params
    x = jnp.concatenate([obs, action], axis=1)
    x = jax.nn.relu(x @ w1.T + b1)
    x = jax.nn.relu(x @ w2.T + b2)
    return x @ w3.T + b3


def dqn_ref_matched(obs, action, prepared_params):
    """Precision-matched reference (bf16 operands, f32 accumulate) — mirrors
    the kernel's numeric policy for a tight structural check."""
    w1t, b12, w2t, w3row, b3s = prepared_params
    x = jnp.concatenate([obs, action], axis=1).astype(jnp.bfloat16)
    h1 = jax.nn.relu(jnp.dot(x, w1t, preferred_element_type=jnp.float32)
                     + b12[0, :_HIDDEN])
    h2 = jax.nn.relu(jnp.dot(h1.astype(jnp.bfloat16), w2t,
                             preferred_element_type=jnp.float32)
                     + b12[0, _HIDDEN:])
    return (h2 * w3row[0]).sum(-1, keepdims=True) + b3s[0]


if __name__ == "__main__":
    num_features = 16
    key = jax.random.PRNGKey(0)
    k_obs, k_act, k_param, k_obs2, k_act2 = jax.random.split(key, 5)

    params = init_params(k_param, num_features)
    prepared = prepare_params(params, num_features)   # one-time layout prep

    # Small single-tile case (G=1).
    batch = 8
    obs = jax.random.normal(k_obs, (batch, num_features), jnp.float32)
    action = jax.random.normal(k_act, (batch, num_features), jnp.float32)
    out = jax.block_until_ready(dqn_forward(obs, action, prepared))
    assert out.shape == (batch, 1), out.shape
    # Dtype-aware tolerances: bf16 matmul path vs. pure-f32 PyTorch semantics.
    assert jnp.allclose(out, dqn_ref(obs, action, params), atol=5e-2, rtol=5e-2)
    assert jnp.allclose(out, dqn_ref_matched(obs, action, prepared),
                        atol=2e-3, rtol=2e-3)

    # Multi-tile case with a ragged trailing block (B=600 -> G=2, TB=304,
    # 8 pad rows handled by Pallas, sliced off in the wrapper).
    batch2 = 600
    obs2 = jax.random.normal(k_obs2, (batch2, num_features), jnp.float32)
    act2 = jax.random.normal(k_act2, (batch2, num_features), jnp.float32)
    out2 = jax.block_until_ready(dqn_forward(obs2, act2, prepared))
    assert out2.shape == (batch2, 1), out2.shape
    assert jnp.allclose(out2, dqn_ref(obs2, act2, params), atol=5e-2, rtol=5e-2)
    assert jnp.allclose(out2, dqn_ref_matched(obs2, act2, prepared),
                        atol=2e-3, rtol=2e-3)

    print("KERNEL_OK")
</pallas_src>

<mosaic_0001>
module attributes {stable_mosaic.version = 11 : i64} {
  func.func @_dqn_kernel(%arg0: i32, %arg1: memref<8x16xf32, #tpu.memory_space<vmem>>, %arg2: memref<8x16xf32, #tpu.memory_space<vmem>>, %arg3: memref<32x64xbf16, #tpu.memory_space<vmem>>, %arg4: memref<1x128xf32, #tpu.memory_space<vmem>>, %arg5: memref<64x64xbf16, #tpu.memory_space<vmem>>, %arg6: memref<1x64xf32, #tpu.memory_space<vmem>>, %arg7: memref<1xf32, #tpu.memory_space<smem>>, %arg8: memref<1x1x8xf32, #tpu.memory_space<vmem>>) attributes {dimension_semantics = [#tpu.dimension_semantics<parallel>], iteration_bounds = array<i64: 1>, scalar_prefetch = 0 : i64, scratch_operands = 0 : i64, tpu.core_type = #tpu.core_type<tc>, window_params = [{transform_indices = @transform_0, window_bounds = array<i64: 8, 16>}, {transform_indices = @transform_1, window_bounds = array<i64: 8, 16>}, {pipeline_mode = #tpu.pipeline_mode<synchronous>, transform_indices = @transform_2, window_bounds = array<i64: 32, 64>}, {pipeline_mode = #tpu.pipeline_mode<synchronous>, transform_indices = @transform_3, window_bounds = array<i64: 1, 128>}, {pipeline_mode = #tpu.pipeline_mode<synchronous>, transform_indices = @transform_4, window_bounds = array<i64: 64, 64>}, {pipeline_mode = #tpu.pipeline_mode<synchronous>, transform_indices = @transform_5, window_bounds = array<i64: 1, 64>}, {transform_indices = @transform_6, window_bounds = array<i64: 1>}, {transform_indices = @transform_7, window_bounds = array<i64: 1, 1, 8>}]} {
    %c0 = arith.constant 0 : index
    %c0_0 = arith.constant 0 : index
    %0 = vector.load %arg1[%c0, %c0_0] : memref<8x16xf32, #tpu.memory_space<vmem>>, vector<8x16xf32>
    %c0_1 = arith.constant 0 : index
    %c0_2 = arith.constant 0 : index
    %1 = vector.load %arg2[%c0_1, %c0_2] : memref<8x16xf32, #tpu.memory_space<vmem>>, vector<8x16xf32>
    %2 = tpu.concatenate %0, %1 in 1 : vector<8x16xf32>, vector<8x16xf32> -> vector<8x32xf32>
    %3 = arith.truncf %2 : vector<8x32xf32> to vector<8x32xbf16>
    %c0_3 = arith.constant 0 : index
    %c0_4 = arith.constant 0 : index
    %4 = vector.load %arg3[%c0_3, %c0_4] : memref<32x64xbf16, #tpu.memory_space<vmem>>, vector<32x64xbf16>
    %cst = arith.constant dense<0.000000e+00> : vector<8x64xf32>
    %5 = tpu.matmul %3, %4, %cst {dimension_numbers = #tpu.dot_dimension_numbers<[1], [0], [0], [1], [0, 0, 1, 1], [], []>} : vector<8x32xbf16>, vector<32x64xbf16>, vector<8x64xf32> -> vector<8x64xf32>
    %c0_5 = arith.constant 0 : index
    %c0_6 = arith.constant 0 : index
    %6 = vector.load %arg4[%c0_5, %c0_6] : memref<1x128xf32, #tpu.memory_space<vmem>>, vector<1x64xf32>
    %7 = vector.broadcast %6 : vector<1x64xf32> to vector<8x64xf32>
    %8 = arith.addf %5, %7 : vector<8x64xf32>
    %cst_7 = arith.constant 0.000000e+00 : f32
    %9 = vector.broadcast %cst_7 : f32 to vector<8x64xf32>
    %10 = arith.maximumf %8, %9 : vector<8x64xf32>
    %11 = arith.truncf %10 : vector<8x64xf32> to vector<8x64xbf16>
    %c0_8 = arith.constant 0 : index
    %c0_9 = arith.constant 0 : index
    %12 = vector.load %arg5[%c0_8, %c0_9] : memref<64x64xbf16, #tpu.memory_space<vmem>>, vector<64x64xbf16>
    %cst_10 = arith.constant dense<0.000000e+00> : vector<8x64xf32>
    %13 = tpu.matmul %11, %12, %cst_10 {dimension_numbers = #tpu.dot_dimension_numbers<[1], [0], [0], [1], [0, 0, 1, 1], [], []>} : vector<8x64xbf16>, vector<64x64xbf16>, vector<8x64xf32> -> vector<8x64xf32>
    %c0_11 = arith.constant 0 : index
    %c64 = arith.constant 64 : index
    %14 = vector.load %arg4[%c0_11, %c64] : memref<1x128xf32, #tpu.memory_space<vmem>>, vector<1x64xf32>
    %15 = vector.broadcast %14 : vector<1x64xf32> to vector<8x64xf32>
    %16 = arith.addf %13, %15 : vector<8x64xf32>
    %cst_12 = arith.constant 0.000000e+00 : f32
    %17 = vector.broadcast %cst_12 : f32 to vector<8x64xf32>
    %18 = arith.maximumf %16, %17 : vector<8x64xf32>
    %c0_13 = arith.constant 0 : index
    %c0_14 = arith.constant 0 : index
    %19 = vector.load %arg6[%c0_13, %c0_14] : memref<1x64xf32, #tpu.memory_space<vmem>>, vector<1x64xf32>
    %20 = vector.broadcast %19 : vector<1x64xf32> to vector<8x64xf32>
    %21 = arith.mulf %18, %20 : vector<8x64xf32>
    %cst_15 = arith.constant dense<0.000000e+00> : vector<8xf32>
    %22 = vector.multi_reduction <add>, %21, %cst_15 [1] : vector<8x64xf32> to vector<8xf32>
    %c0_16 = arith.constant 0 : index
    %23 = memref.load %arg7[%c0_16] : memref<1xf32, #tpu.memory_space<smem>>
    %24 = vector.broadcast %23 : f32 to vector<8xf32>
    %25 = arith.addf %22, %24 : vector<8xf32>
    %26 = vector.shape_cast %25 : vector<8xf32> to vector<1x1x8xf32>
    %c0_17 = arith.constant 0 : index
    %c0_18 = arith.constant 0 : index
    %c0_19 = arith.constant 0 : index
    %27 = vector.load %arg8[%c0_17, %c0_18, %c0_19] : memref<1x1x8xf32, #tpu.memory_space<vmem>>, vector<1x1x8xf32>
    tpu.vector_store %arg8[%c0_17, %c0_18, %c0_19], %26 {strides = array<i32>} : memref<1x1x8xf32, #tpu.memory_space<vmem>>, vector<1x1x8xf32>,
    return
  }
  func.func @transform_0(%arg0: i32) -> (i32, i32) {
    %c0_i32 = arith.constant 0 : i32
    %c0_i32_0 = arith.constant 0 : i32
    return %arg0, %c0_i32 : i32, i32
  }
  func.func @transform_1(%arg0: i32) -> (i32, i32) {
    %c0_i32 = arith.constant 0 : i32
    %c0_i32_0 = arith.constant 0 : i32
    return %arg0, %c0_i32 : i32, i32
  }
  func.func @transform_2(%arg0: i32) -> (i32, i32) {
    %c0_i32 = arith.constant 0 : i32
    %c0_i32_0 = arith.constant 0 : i32
    %c0_i32_1 = arith.constant 0 : i32
    return %c0_i32, %c0_i32_0 : i32, i32
  }
  func.func @transform_3(%arg0: i32) -> (i32, i32) {
    %c0_i32 = arith.constant 0 : i32
    %c0_i32_0 = arith.constant 0 : i32
    %c0_i32_1 = arith.constant 0 : i32
    return %c0_i32, %c0_i32_0 : i32, i32
  }
  func.func @transform_4(%arg0: i32) -> (i32, i32) {
    %c0_i32 = arith.constant 0 : i32
    %c0_i32_0 = arith.constant 0 : i32
    %c0_i32_1 = arith.constant 0 : i32
    return %c0_i32, %c0_i32_0 : i32, i32
  }
  func.func @transform_5(%arg0: i32) -> (i32, i32) {
    %c0_i32 = arith.constant 0 : i32
    %c0_i32_0 = arith.constant 0 : i32
    %c0_i32_1 = arith.constant 0 : i32
    return %c0_i32, %c0_i32_0 : i32, i32
  }
  func.func @transform_6(%arg0: i32) -> i32 {
    %c0_i32 = arith.constant 0 : i32
    %c0_i32_0 = arith.constant 0 : i32
    return %c0_i32 : i32
  }
  func.func @transform_7(%arg0: i32) -> (i32, i32, i32) {
    %c0_i32 = arith.constant 0 : i32
    %c0_i32_0 = arith.constant 0 : i32
    %c0_i32_1 = arith.constant 0 : i32
    return %arg0, %c0_i32, %c0_i32_0 : i32, i32, i32
  }
}

</mosaic_0001>

<llo_original>
// kernel: dqn_forward.1
$region0: #{dqn_forward.1}
  #allocation0 [shape = 'u32[]', space=smem, size = 0x4, offset = 0x4, fixed_abs, tag = 'smem constant byte address 0x4 - core index']
  #allocation1 [shape = 'u32[144,128]{1,0:T(1,128)}', space=vmem, size = 0x12000, scoped, tag = 'internal scratch']
  #allocation2 [shape = 'f32[1]{0:T(128)S(6)}', space=smem, size = 0x200, scoped, tag = 'scoped memory for dqn_forward.1']
  %s0 = inlined_call_operand.hbm [shape: f32[8,16], index: 0, kind: input, shape index: {}]
  %s1 = inlined_call_operand.hbm [shape: f32[8,16], index: 1, kind: input, shape index: {}]
  %s2 = inlined_call_operand.hbm [shape: bf16[32,64], index: 2, kind: input, shape index: {}]
  %s3 = inlined_call_operand.vmem [shape: f32[1,128], index: 3, kind: input, shape index: {}]
  %s4 = inlined_call_operand.hbm [shape: bf16[64,64], index: 4, kind: input, shape index: {}]
  %s5 = inlined_call_operand.vmem [shape: f32[1,64], index: 5, kind: input, shape index: {}]
  %s6 = inlined_call_operand.<no memory space> [shape: f32[1], index: 6, kind: input, shape index: {}]
  %s7 = inlined_call_operand.hbm [shape: f32[1,1,8], index: 7, kind: output, shape index: {}]
  %s8 = sld [smem:[#allocation0]]
  $region54: #{dqn_forward.1} parent=0
    _
  %s10 = ssub.s32 1, %s8
  %s11 = scalar_select 0, %s10, %s8
  %12 = sst [smem:[#allocation2]] %s6
  $region1: #{dqn_forward.1} parent=0
    #allocation3 [shape = 'u8[4096]{0}', space=vmem, size = 0x1000, scoped, tag = 'input window, operand 0, single buffered']
    #allocation4 [shape = 's32[1]{0}', space=sflag, size = 0x4, scoped, tag = 'scoped memory for dqn_forward.1']
    #allocation5 [shape = 's32[1]{0}', space=sflag, size = 0x4, scoped, tag = 'scoped memory for dqn_forward.1']
    #allocation6 [shape = 'u8[4096]{0}', space=vmem, size = 0x1000, scoped, tag = 'input window, operand 1, single buffered']
    #allocation7 [shape = 's32[1]{0}', space=sflag, size = 0x4, scoped, tag = 'scoped memory for dqn_forward.1']
    #allocation8 [shape = 'u8[8192]{0}', space=vmem, size = 0x2000, scoped, tag = 'input window, operand 2, single buffered']
    #allocation9 [shape = 'u8[16384]{0}', space=vmem, size = 0x4000, scoped, tag = 'input window, operand 4, single buffered']
    #allocation10 [shape = 's32[1]{0}', space=sflag, size = 0x4, scoped, tag = 'scoped memory for dqn_forward.1']
    #allocation11 [shape = 'u8[512]{0}', space=vmem, size = 0x400, scoped, tag = 'output window, operand 0, single buffered']
    %13 = vsyncpa [#allocation4], 0
    %14 = vsyncpa [#allocation7], 0
    %15 = vsyncpa [#allocation10], 0
    %16 = vsyncpa [#allocation5], 0
    // Predicated region
    $region2: #{dqn_forward.1} parent=1 // pred_check
      _
    $region3: #{dqn_forward.1} parent=1 // pred_check_branch
      %18 = sbr.rel (0) target = $region5
    $region4: #{dqn_forward.1} parent=1 // pred_region
      %s20 = ssub.s32 128, 128
      %21 = vsyncadd [#allocation4], %s20
      %s23 = sshll.u32 [#allocation3], 4
      %s24 = int_to_ptr.vmem [resolvable:$true] %s23
      %26 = dma.hbm_to_vmem [thread:$0]  %s0, 128, %s24, [#allocation4]
    $region5: #{dqn_forward.1} parent=1 // pred_fallthru
      _
    // Predicated region
    $region6: #{dqn_forward.1} parent=1 // pred_check
      _
    $region7: #{dqn_forward.1} parent=1 // pred_check_branch
      %28 = sbr.rel (0) target = $region9
    $region8: #{dqn_forward.1} parent=1 // pred_region
      %s30 = ssub.s32 128, 128
      %31 = vsyncadd [#allocation7], %s30
      %s33 = sshll.u32 [#allocation6], 4
      %s34 = int_to_ptr.vmem [resolvable:$true] %s33
      %36 = dma.hbm_to_vmem [thread:$0]  %s1, 128, %s34, [#allocation7]
    $region9: #{dqn_forward.1} parent=1 // pred_fallthru
      _
    // Predicated region
    $region10: #{dqn_forward.1} parent=1 // pred_check
      _
    $region11: #{dqn_forward.1} parent=1 // pred_check_branch
      %38 = sbr.rel (0) target = $region13
    $region12: #{dqn_forward.1} parent=1 // pred_region
      %s40 = ssub.s32 256, 256
      %41 = vsyncadd [#allocation7], %s40
      %s42 = sshll.u32 [#allocation8], 4
      %s43 = int_to_ptr.vmem [resolvable:$true] %s42
      %48 = dma.hbm_to_vmem [thread:$0]  %s2, 256, %s43, [#allocation7], 64, 64, 4
    $region13: #{dqn_forward.1} parent=1 // pred_fallthru
      _
    // Predicated region
    $region14: #{dqn_forward.1} parent=1 // pred_check
      _
    $region15: #{dqn_forward.1} parent=1 // pred_check_branch
      %50 = sbr.rel (0) target = $region17
    $region16: #{dqn_forward.1} parent=1 // pred_region
      _
    $region17: #{dqn_forward.1} parent=1 // pred_fallthru
      _
    // Predicated region
    $region18: #{dqn_forward.1} parent=1 // pred_check
      _
    $region19: #{dqn_forward.1} parent=1 // pred_check_branch
      %52 = sbr.rel (0) target = $region21
    $region20: #{dqn_forward.1} parent=1 // pred_region
      %s54 = ssub.s32 512, 512
      %55 = vsyncadd [#allocation10], %s54
      %s56 = sshll.u32 [#allocation9], 4
      %s57 = int_to_ptr.vmem [resolvable:$true] %s56
      %62 = dma.hbm_to_vmem [thread:$0]  %s4, 512, %s57, [#allocation10], 64, 64, 4
    $region21: #{dqn_forward.1} parent=1 // pred_fallthru
      _
    // Predicated region
    $region22: #{dqn_forward.1} parent=1 // pred_check
      _
    $region23: #{dqn_forward.1} parent=1 // pred_check_branch
      %64 = sbr.rel (0) target = $region25
    $region24: #{dqn_forward.1} parent=1 // pred_region
      _
    $region25: #{dqn_forward.1} parent=1 // pred_fallthru
      _
    // Predicated region
    $region26: #{dqn_forward.1} parent=1 // pred_check
      _
    $region27: #{dqn_forward.1} parent=1 // pred_check_branch
      %66 = sbr.rel (0) target = $region29
    $region28: #{dqn_forward.1} parent=1 // pred_region
      _
    $region29: #{dqn_forward.1} parent=1 // pred_fallthru
      _
    // Predicated region
    $region30: #{dqn_forward.1} parent=1 // pred_check
      _
    $region31: #{dqn_forward.1} parent=1 // pred_check_branch
      %68 = sbr.rel (0) target = $region33
    $region32: #{dqn_forward.1} parent=1 // pred_region
      %69 = dma.done [#allocation4], 128
    $region33: #{dqn_forward.1} parent=1 // pred_fallthru
      _
    // Predicated region
    $region34: #{dqn_forward.1} parent=1 // pred_check
      _
    $region35: #{dqn_forward.1} parent=1 // pred_check_branch
      %71 = sbr.rel (0) target = $region37
    $region36: #{dqn_forward.1} parent=1 // pred_region
      %72 = dma.done [#allocation7], 128
    $region37: #{dqn_forward.1} parent=1 // pred_fallthru
      _
    // Predicated region
    $region38: #{dqn_forward.1} parent=1 // pred_check
      _
    $region39: #{dqn_forward.1} parent=1 // pred_check_branch
      %74 = sbr.rel (0) target = $region41
    $region40: #{dqn_forward.1} parent=1 // pred_region
      %75 = dma.done [#allocation7], 256
    $region41: #{dqn_forward.1} parent=1 // pred_fallthru
      _
    // Predicated region
    $region42: #{dqn_forward.1} parent=1 // pred_check
      _
    $region43: #{dqn_forward.1} parent=1 // pred_check_branch
      %77 = sbr.rel (0) target = $region45
    $region44: #{dqn_forward.1} parent=1 // pred_region
      %78 = dma.done [#allocation10], 512
    $region45: #{dqn_forward.1} parent=1 // pred_fallthru
      _
    %v80 = vld [vmem:[#allocation3] sm:$0xff]
    %v81 = vld [vmem:[#allocation6] sm:$0xff]
    %83 = vrot.lane.b32.xlu0 %v81, 16
    %v84 = vpop.permute.xlu0 %83
    %vm86 = vcmask 130048
    %v87 = vsel %vm86, %v80, %v84
    %v88 = vpack.c.bf16 %v87, %v87
    %v89 = vld [vmem:[#allocation8] sm:$0xf]
    %v90 = vld [vmem:[#allocation8 + $0x4] sm:$0xf]
    %v91 = vld [vmem:[#allocation8 + $0x8] sm:$0xf]
    %v92 = vld [vmem:[#allocation8 + $0xc] sm:$0xf]
    %v93 = vld [vmem:[%s3] sm:$0x1]
    %v95 = vlaneseq
    %v96 = vshrl.u32 %v95, 7
    %v97 = vsub.s32 0, %v96
    %v98 = vrot.slane %v93, %v97
    %v104 = vunpack.c.l.b16 %v89
    %v105 = vunpack.c.l.b16 %v90
    %v106 = vunpack.c.l.b16 %v91
    %v107 = vunpack.c.l.b16 %v92
    %v108 = vpack.c.b16 %v105, %v104
    %v109 = vpack.c.b16 %v107, %v106
    %vm112 = vcmask 261120
    %v114 = vsel %vm112, %v88, 0
    %116 = vmatprep.subr.bf16.mxu0 0
    %117 = vmatpush1.bf16.msra.mxu0 %v108
    %118 = vmatprep.subr.bf16.mxu0 0
    %119 = vmatpush1.bf16.msra.mxu0 %v109
    %120 = vmatprep.subr.bf16.mxu0 0
    %121 = vmatpush1.bf16.msra.mxu0 0
    %122 = vmatprep.subr.bf16.mxu0 0
    %123 = vmatpush1.bf16.msra.mxu0 0
    %124 = vmatprep.subr.bf16.mxu0 0
    %125 = vmatpush1.bf16.msra.mxu0 0
    %126 = vmatprep.subr.bf16.mxu0 0
    %127 = vmatpush1.bf16.msra.mxu0 0
    %128 = vmatprep.subr.bf16.mxu0 0
    %129 = vmatpush1.bf16.msra.mxu0 0
    %130 = vmatprep.subr.bf16.mxu0 0
    %131 = vmatpush1.bf16.msra.mxu0 0
    %132 = vmatprep.subr.bf16.mxu0 0
    %133 = vmatpush1.bf16.msra.mxu0 0
    %134 = vmatprep.subr.bf16.mxu0 0
    %135 = vmatpush1.bf16.msra.mxu0 0
    %136 = vmatprep.subr.bf16.mxu0 0
    %137 = vmatpush1.bf16.msra.mxu0 0
    %138 = vmatprep.subr.bf16.mxu0 0
    %139 = vmatpush1.bf16.msra.mxu0 0
    %140 = vmatprep.subr.bf16.mxu0 0
    %141 = vmatpush1.bf16.msra.mxu0 0
    %142 = vmatprep.subr.bf16.mxu0 0
    %143 = vmatpush1.bf16.msra.mxu0 0
    %144 = vmatprep.subr.bf16.mxu0 0
    %145 = vmatpush1.bf16.msra.mxu0 0
    %146 = vmatprep.subr.bf16.mxu0 0
    %147 = vmatpush1.bf16.msra.mxu0 0
    %148 = vmatprep.mubr.bf16.mxu0 0
    %149 = vmatmul.mubr.bf16.gmra.mrb[0].mxu0 %v114
    %v150 = vpop.f32.mrb[0].mxu0
    %v151 = vadd.f32 %v98, %v150
    %v152 = vpop.f32.mrb[0].mxu0
    %v153 = vpop.f32.mrb[0].mxu0
    %v154 = vpop.f32.mrb[0].mxu0
    %155 = vdwg.mxu0
    %v156 = vmax.f32 %v151, 0.0
    %v157 = vpack.c.bf16 %v156, %v156
    %v158 = vld [vmem:[#allocation9] sm:$0xf]
    %v159 = vld [vmem:[#allocation9 + $0x4] sm:$0xf]
    %v160 = vld [vmem:[#allocation9 + $0x8] sm:$0xf]
    %v161 = vld [vmem:[#allocation9 + $0xc] sm:$0xf]
    %v162 = vld [vmem:[#allocation9 + $0x10] sm:$0xf]
    %v163 = vld [vmem:[#allocation9 + $0x14] sm:$0xf]
    %v164 = vld [vmem:[#allocation9 + $0x18] sm:$0xf]
    %v165 = vld [vmem:[#allocation9 + $0x1c] sm:$0xf]
    %v174 = vunpack.c.l.b16 %v158
    %v175 = vunpack.c.l.b16 %v159
    %v176 = vunpack.c.l.b16 %v160
    %v177 = vunpack.c.l.b16 %v161
    %v178 = vunpack.c.l.b16 %v162
    %v179 = vunpack.c.l.b16 %v163
    %v180 = vunpack.c.l.b16 %v164
    %v181 = vunpack.c.l.b16 %v165
    %v182 = vpack.c.b16 %v175, %v174
    %v183 = vpack.c.b16 %v177, %v176
    %v184 = vpack.c.b16 %v179, %v178
    %v185 = vpack.c.b16 %v181, %v180
    %190 = vrot.lane.b32.xlu0 %v98, 64
    %v191 = vpop.permute.xlu0 %190
    %vm193 = vcmask 523264
    %v195 = vsel %vm193, %v157, 0
    %197 = vmatprep.subr.bf16.mxu0 0
    %198 = vmatpush1.bf16.msra.mxu0 %v182
    %199 = vmatprep.subr.bf16.mxu0 0
    %200 = vmatpush1.bf16.msra.mxu0 %v183
    %201 = vmatprep.subr.bf16.mxu0 0
    %202 = vmatpush1.bf16.msra.mxu0 %v184
    %203 = vmatprep.subr.bf16.mxu0 0
    %204 = vmatpush1.bf16.msra.mxu0 %v185
    %205 = vmatprep.subr.bf16.mxu0 0
    %206 = vmatpush1.bf16.msra.mxu0 0
    %207 = vmatprep.subr.bf16.mxu0 0
    %208 = vmatpush1.bf16.msra.mxu0 0
    %209 = vmatprep.subr.bf16.mxu0 0
    %210 = vmatpush1.bf16.msra.mxu0 0
    %211 = vmatprep.subr.bf16.mxu0 0
    %212 = vmatpush1.bf16.msra.mxu0 0
    %213 = vmatprep.subr.bf16.mxu0 0
    %214 = vmatpush1.bf16.msra.mxu0 0
    %215 = vmatprep.subr.bf16.mxu0 0
    %216 = vmatpush1.bf16.msra.mxu0 0
    %217 = vmatprep.subr.bf16.mxu0 0
    %218 = vmatpush1.bf16.msra.mxu0 0
    %219 = vmatprep.subr.bf16.mxu0 0
    %220 = vmatpush1.bf16.msra.mxu0 0
    %221 = vmatprep.subr.bf16.mxu0 0
    %222 = vmatpush1.bf16.msra.mxu0 0
    %223 = vmatprep.subr.bf16.mxu0 0
    %224 = vmatpush1.bf16.msra.mxu0 0
    %225 = vmatprep.subr.bf16.mxu0 0
    %226 = vmatpush1.bf16.msra.mxu0 0
    %227 = vmatprep.subr.bf16.mxu0 0
    %228 = vmatpush1.bf16.msra.mxu0 0
    %229 = vmatprep.mubr.bf16.mxu0 0
    %230 = vmatmul.mubr.bf16.gmra.mrb[0].mxu0 %v195
    %v231 = vpop.f32.mrb[0].mxu0
    %v232 = vadd.f32 %v191, %v231
    %v233 = vpop.f32.mrb[0].mxu0
    %v234 = vpop.f32.mrb[0].mxu0
    %v235 = vpop.f32.mrb[0].mxu0
    %236 = vdwg.mxu0
    %v237 = vmax.f32 %v232, 0.0
    %v238 = vld [vmem:[%s5] sm:$0x1]
    %v240 = vlaneseq
    %v241 = vshrl.u32 %v240, 7
    %v242 = vsub.s32 0, %v241
    %v243 = vrot.slane %v238, %v242
    %v245 = vmul.f32 %v237, %v243
    %v246 = vsel %vm193, %v245, 0.0
    %247 = vadd.xlane.f32.xlu0 %v246
    %v248 = vpop.xlane.xlu0 %247
    %s249 = sld [smem:[#allocation2]]
    %v250 = vstv %s249
    %v251 = vadd.f32 %v248, %v250
    %v253 = vlaneseq
    %v254 = vand.u32 %v253, 127
    %v255 = vlaneseq
    %v256 = vshrl.u32 %v255, 7
    %v257 = vsub.s32 %v254, %v256
    %v258 = vrot.slane %v251, %v257
    %vm260 = vcmask 57344
    %261 = vst.msk [vmem:[#allocation11] sm:$0x1] %vm260, %v258
    // Predicated region
    $region46: #{dqn_forward.1} parent=1 // pred_check
      _
    $region47: #{dqn_forward.1} parent=1 // pred_check_branch
      %263 = sbr.rel (0) target = $region49
    $region48: #{dqn_forward.1} parent=1 // pred_region
      %s265 = ssub.s32 16, 16
      %266 = vsyncadd [#allocation5], %s265
      %s268 = sshll.u32 [#allocation11], 4
      %s269 = int_to_ptr.vmem [resolvable:$true] %s268
      %271 = dma.vmem_to_hbm [thread:$0]  %s269, 16, %s7, [#allocation5]
    $region49: #{dqn_forward.1} parent=1 // pred_fallthru
      _
    // Predicated region
    $region50: #{dqn_forward.1} parent=1 // pred_check
      _
    $region51: #{dqn_forward.1} parent=1 // pred_check_branch
      %273 = sbr.rel (0) target = $region53
    $region52: #{dqn_forward.1} parent=1 // pred_region
      %274 = dma.done [#allocation5], 16
    $region53: #{dqn_forward.1} parent=1 // pred_fallthru
      _
    %275 = vsyncpa [#allocation4], 1
    %276 = vsyncpa [#allocation7], 1
    %277 = vsyncpa [#allocation10], 1
    %278 = vsyncpa [#allocation5], 1

</llo_original>
